<compile_context>
chip_gen: v7x
topology: tpu7x:2x2x1
jax: 0.10.0
libtpu: 0.0.40
codegen_flags: <defaults>
</compile_context>

<pallas_src>
import jax
import jax.numpy as jnp
from jax import lax
from jax.experimental import pallas as pl
from jax.experimental.pallas import tpu as pltpu


# ----------------------------------------------------------------------------
# Shared per-tile math
# ----------------------------------------------------------------------------
def _loss_tile_body(dt, ft, halos, out_ref, TH, W, invalid_value):
    """DepthLoss partial sums for one (TH, W) tile.

    dt, ft : (TH, W) float32 depth target / prediction.
    halos  : None (tile == whole image; zero padding at all edges) or a tuple
             (dt_above, dt_below, ft_above, ft_below) of (1, W) float32 rows
             immediately above/below the tile (already zeroed when the tile
             touches the image top/bottom).
    Writes [num, cnt] to out_ref[0, 0, 0, 0:2]; the rest of the block is 0.
    """
    row = lax.broadcasted_iota(jnp.int32, (TH, W), 0)
    col = lax.broadcasted_iota(jnp.int32, (TH, W), 1)
    top = row == 0
    bot = row == TH - 1
    lft = col == 0
    rgt = col == W - 1

    if halos is None:
        dt_above = dt_below = ft_above = ft_below = None
    else:
        dt_above, dt_below, ft_above, ft_below = halos

    def up(x, above):      # y[i, j] = x[i-1, j]; row -1 supplied by `above` (or 0)
        r = pltpu.roll(x, shift=1, axis=0)
        return jnp.where(top, 0.0 if above is None else above, r)

    def down(x, below):    # y[i, j] = x[i+1, j]; row TH supplied by `below` (or 0)
        r = pltpu.roll(x, shift=TH - 1, axis=0)
        return jnp.where(bot, 0.0 if below is None else below, r)

    def lsh(x):            # y[i, j] = x[i, j-1]  (0 at j == 0)
        return jnp.where(lft, 0.0, pltpu.roll(x, shift=1, axis=1))

    def rsh(x):            # y[i, j] = x[i, j+1]  (0 at j == W-1)
        return jnp.where(rgt, 0.0, pltpu.roll(x, shift=W - 1, axis=1))

    def hsm_row(r1):       # horizontal (1,2,1) smooth of a (1, W) halo row
        if r1 is None:
            return None
        colr = lax.broadcasted_iota(jnp.int32, (1, W), 1)
        l = jnp.where(colr == 0, 0.0, pltpu.roll(r1, shift=1, axis=1))
        rr = jnp.where(colr == W - 1, 0.0, pltpu.roll(r1, shift=W - 1, axis=1))
        return l + 2.0 * r1 + rr

    # --- x-gradient (Sobel kx) phase.  Everything that depends on gx is folded
    # into running accumulators so gtx/gpx/sv_* die before the y phase starts
    # (keeps the live full-tile set ~6 arrays instead of ~10 -> less spill).
    sv_t = up(dt, dt_above) + 2.0 * dt + down(dt, dt_below)     # vertical 1-2-1
    gtx = lsh(sv_t) - rsh(sv_t)
    sv_p = up(ft, ft_above) + 2.0 * ft + down(ft, ft_below)
    gpx = lsh(sv_p) - rsh(sv_p)

    log_prod = (jnp.abs(dt - ft) + 0.5) * (jnp.abs(gtx - gpx) + 0.5)
    dotp = gpx * gtx + 1.0            # normals are (-dx, -dy, 1)
    nrm_p = gpx * gpx + 1.0
    nrm_t = gtx * gtx + 1.0

    # --- y-gradient (Sobel ky) phase.
    sh_t = lsh(dt) + 2.0 * dt + rsh(dt)                         # horizontal 1-2-1
    gty = up(sh_t, hsm_row(dt_above)) - down(sh_t, hsm_row(dt_below))
    if invalid_value is not None:     # last use of dt: validity mask
        mask = (dt != jnp.float32(invalid_value)).astype(jnp.float32)
    sh_p = lsh(ft) + 2.0 * ft + rsh(ft)
    gpy = up(sh_p, hsm_row(ft_above)) - down(sh_p, hsm_row(ft_below))

    log_prod = log_prod * (jnp.abs(gty - gpy) + 0.5)
    dotp = dotp + gpy * gty
    nrm_p = nrm_p + gpy * gpy
    nrm_t = nrm_t + gty * gty

    # Fused log of the three (>= 0.5) factors (1 log instead of 3) + cosine
    # term with a single rsqrt.  The +1.0 keeps both squared norms >= 1, so
    # CosineSimilarity's eps=0 is moot and the product cannot underflow.
    term = jnp.log(log_prod) + jnp.abs(1.0 - dotp * lax.rsqrt(nrm_p * nrm_t))

    if invalid_value is None:
        num = jnp.sum(term)
        cnt = jnp.float32(TH * W)
    else:
        num = jnp.sum(term * mask)
        cnt = jnp.sum(mask)

    sub = lax.broadcasted_iota(jnp.int32, (1, 1, 8, 128), 2)
    lane = lax.broadcasted_iota(jnp.int32, (1, 1, 8, 128), 3)
    out_ref[...] = jnp.where((sub == 0) & (lane == 0), num,
                             jnp.where((sub == 0) & (lane == 1), cnt, 0.0))


# ----------------------------------------------------------------------------
# Kernels
# ----------------------------------------------------------------------------
def _make_whole_image_kernel(H, W, invalid_value):
    """One tile == one full (H, W) image; zero padding handled in-kernel."""
    def kernel(dt_ref, ft_ref, out_ref):
        dt = dt_ref[0].astype(jnp.float32)
        ft = ft_ref[0].astype(jnp.float32)
        _loss_tile_body(dt, ft, None, out_ref, H, W, invalid_value)
    return kernel


def _make_row_tiled_kernel(TH, W, R, invalid_value):
    """Row-tiled kernel with 1-row halos taken from 8-row halo blocks."""
    def kernel(dt_ref, ft_ref, dta_ref, dtb_ref, fta_ref, ftb_ref, out_ref):
        r = pl.program_id(1)
        not_top = r > 0
        not_bot = r < R - 1

        dt = dt_ref[0].astype(jnp.float32)      # (TH, W)
        ft = ft_ref[0].astype(jnp.float32)

        # Halo rows: last row of the 8-row block just above the tile / first
        # row of the block just below; zeroed at the image boundary so the
        # stitched result matches conv2d's zero padding.
        dt_above = jnp.where(not_top, dta_ref[0][7:8, :].astype(jnp.float32), 0.0)
        dt_below = jnp.where(not_bot, dtb_ref[0][0:1, :].astype(jnp.float32), 0.0)
        ft_above = jnp.where(not_top, fta_ref[0][7:8, :].astype(jnp.float32), 0.0)
        ft_below = jnp.where(not_bot, ftb_ref[0][0:1, :].astype(jnp.float32), 0.0)

        _loss_tile_body(dt, ft, (dt_above, dt_below, ft_above, ft_below),
                        out_ref, TH, W, invalid_value)
    return kernel


# ----------------------------------------------------------------------------
# Wrapper
# ----------------------------------------------------------------------------
def _choose_row_tile(H, W, target_bytes=1 << 20):
    """Largest multiple-of-8 divisor of H whose (TH, W) f32 block ~ target_bytes."""
    if H % 8 != 0 or H * W * 4 <= 2 * target_bytes:
        # TODO(synk): very large images whose H is not a multiple of 8 still
        # take the whole-image path; pad-and-mask row tiling would cover them.
        return H
    limit = max(8, min(H, target_bytes // (4 * W)))
    limit = max(8, limit - (limit % 8))
    for th in range(int(limit), 7, -8):
        if H % th == 0:
            return th
    return H


def depth_loss(features, depth_target, invalid_value=None, row_tile=None):
    """features: (B, 1, H, W); depth_target: (B, H, W). Returns scalar loss."""
    B, C, H, W = features.shape
    assert C == 1, "Sobel conv expects a single input channel"
    assert depth_target.shape == (B, H, W)

    ft = features[:, 0, :, :]
    dt = depth_target
    # bf16 inputs are streamed as-is (half the HBM bytes) and upcast in-kernel;
    # anything else is promoted to f32 on the host side.  Note: with bf16
    # inputs the validity mask compares bf16-quantized depth to invalid_value.
    # TODO(synk): on v5e (HBM-bound after the VALU cuts) optionally downcast
    # f32 inputs to bf16 here to halve streamed bytes.
    if ft.dtype != jnp.bfloat16:
        ft = ft.astype(jnp.float32)
    if dt.dtype != jnp.bfloat16:
        dt = dt.astype(jnp.float32)

    TH = _choose_row_tile(H, W) if row_tile is None else int(row_tile)
    assert H % TH == 0, "row_tile must divide H"
    assert TH == H or TH % 8 == 0, "row_tile must be a multiple of 8 (or H)"
    R = H // TH

    elems = B * H * W
    itemsize = jnp.dtype(dt.dtype).itemsize + jnp.dtype(ft.dtype).itemsize
    halo_elems = B * R * 16 * W if R > 1 else 0
    cost = pl.CostEstimate(
        flops=60 * elems,
        transcendentals=2 * elems,                # 1 log + 1 rsqrt per element
        bytes_accessed=(elems + halo_elems) * itemsize + B * R * 8 * 128 * 4)
    # 32 MiB is ample after row tiling and leaves headroom on v7x's 64 MiB TC;
    # only the whole-image fallback may raise it (capped well below 64 MiB).
    vmem_limit = int(min(48 << 20, max(32 << 20, 16 * TH * W * 4)))

    out_shape = jax.ShapeDtypeStruct((B, R, 8, 128), jnp.float32)

    if R == 1:
        partials = pl.pallas_call(
            _make_whole_image_kernel(H, W, invalid_value),
            out_shape=out_shape,
            grid=(B,),
            in_specs=[
                pl.BlockSpec((1, H, W), lambda b: (b, 0, 0)),
                pl.BlockSpec((1, H, W), lambda b: (b, 0, 0)),
            ],
            out_specs=pl.BlockSpec((1, 1, 8, 128), lambda b: (b, 0, 0, 0)),
            compiler_params=pltpu.CompilerParams(
                dimension_semantics=("parallel",),
                vmem_limit_bytes=vmem_limit,
            ),
            cost_estimate=cost,
        )(dt, ft)
    else:
        TB = TH // 8          # 8-row blocks per row tile
        HB = H // 8           # 8-row blocks per image (H % 8 == 0 here)

        main = lambda b, r: (b, r, 0)
        above = lambda b, r: (b, jnp.maximum(r * TB - 1, 0), 0)
        below = lambda b, r: (b, jnp.minimum((r + 1) * TB, HB - 1), 0)

        partials = pl.pallas_call(
            _make_row_tiled_kernel(TH, W, R, invalid_value),
            out_shape=out_shape,
            grid=(B, R),
            in_specs=[
                pl.BlockSpec((1, TH, W), main),    # depth tile
                pl.BlockSpec((1, TH, W), main),    # pred tile
                pl.BlockSpec((1, 8, W), above),    # depth halo above
                pl.BlockSpec((1, 8, W), below),    # depth halo below
                pl.BlockSpec((1, 8, W), above),    # pred halo above
                pl.BlockSpec((1, 8, W), below),    # pred halo below
            ],
            out_specs=pl.BlockSpec((1, 1, 8, 128), lambda b, r: (b, r, 0, 0)),
            compiler_params=pltpu.CompilerParams(
                dimension_semantics=("parallel", "parallel"),
                vmem_limit_bytes=vmem_limit,
            ),
            cost_estimate=cost,
        )(dt, ft, dt, dt, ft, ft)

    num = jnp.sum(partials[..., 0])
    cnt = jnp.sum(partials[..., 1])
    # Guard against an all-invalid mask (PyTorch would produce NaN here).
    return num / jnp.maximum(cnt, 1.0) / 3.0


# ----------------------------------------------------------------------------
# Pure-JAX reference (direct 3x3 cross-correlation, zero padding)
# ----------------------------------------------------------------------------
def _sobel_reference(x):
    B, H, W = x.shape
    xp = jnp.pad(x, ((0, 0), (1, 1), (1, 1)))
    sh = lambda di, dj: xp[:, 1 + di:1 + di + H, 1 + dj:1 + dj + W]
    gx = (sh(-1, -1) - sh(-1, 1) + 2.0 * sh(0, -1) - 2.0 * sh(0, 1)
          + sh(1, -1) - sh(1, 1))
    gy = (sh(-1, -1) + 2.0 * sh(-1, 0) + sh(-1, 1)
          - sh(1, -1) - 2.0 * sh(1, 0) - sh(1, 1))
    return gx, gy


def _reference_depth_loss(features, depth_target, invalid_value=None):
    d = depth_target.astype(jnp.float32)
    f = features[:, 0].astype(jnp.float32)
    gtx, gty = _sobel_reference(d)
    gpx, gpy = _sobel_reference(f)
    m = jnp.ones_like(d) if invalid_value is None else (
        d != invalid_value).astype(jnp.float32)
    cnt = m.sum()
    mean = lambda t: (t * m).sum() / cnt
    loss_depth = mean(jnp.log(jnp.abs(d - f) + 0.5))
    loss_dx = mean(jnp.log(jnp.abs(gtx - gpx) + 0.5))
    loss_dy = mean(jnp.log(jnp.abs(gty - gpy) + 0.5))
    dot = gpx * gtx + gpy * gty + 1.0
    cos = dot / (jnp.sqrt(gpx * gpx + gpy * gpy + 1.0) *
                 jnp.sqrt(gtx * gtx + gty * gty + 1.0))
    loss_normal = mean(jnp.abs(1.0 - cos))
    return (loss_depth + loss_dx + loss_dy + loss_normal) / 3.0


if __name__ == "__main__":
    key = jax.random.PRNGKey(0)
    k1, k2, k3, k4 = jax.random.split(key, 4)

    # 1) Small image -> whole-image (single row tile) path.
    B, H, W = 2, 16, 128
    features = jax.random.normal(k1, (B, 1, H, W), dtype=jnp.float32)
    depth_target = jax.random.normal(k2, (B, H, W), dtype=jnp.float32)

    loss = depth_loss(features, depth_target, invalid_value=None)
    jax.block_until_ready(loss)
    ref = _reference_depth_loss(features, depth_target, invalid_value=None)
    assert jnp.allclose(loss, ref, rtol=1e-3, atol=1e-3), (loss, ref)

    loss_masked = depth_loss(features, depth_target, invalid_value=0.0)
    jax.block_until_ready(loss_masked)
    ref_masked = _reference_depth_loss(features, depth_target, invalid_value=0.0)
    assert jnp.allclose(loss_masked, ref_masked, rtol=1e-3, atol=1e-3)

    # 2) Row-tiled (haloed) path: H=128 split into 4 tiles of 32 rows.
    B2, H2, W2 = 2, 128, 128
    features2 = jax.random.normal(k3, (B2, 1, H2, W2), dtype=jnp.float32)
    depth_target2 = jax.random.normal(k4, (B2, H2, W2), dtype=jnp.float32)

    loss2 = depth_loss(features2, depth_target2, invalid_value=None, row_tile=32)
    jax.block_until_ready(loss2)
    ref2 = _reference_depth_loss(features2, depth_target2, invalid_value=None)
    assert jnp.allclose(loss2, ref2, rtol=1e-3, atol=1e-3), (loss2, ref2)

    loss2_masked = depth_loss(features2, depth_target2, invalid_value=0.0,
                              row_tile=32)
    jax.block_until_ready(loss2_masked)
    ref2_masked = _reference_depth_loss(features2, depth_target2,
                                        invalid_value=0.0)
    assert jnp.allclose(loss2_masked, ref2_masked, rtol=1e-3, atol=1e-3)

    print("KERNEL_OK")
</pallas_src>

<mosaic_0001>
module attributes {stable_mosaic.version = 11 : i64} {
  func.func @kernel(%arg0: i32, %arg1: memref<1x16x128xf32, #tpu.memory_space<vmem>>, %arg2: memref<1x16x128xf32, #tpu.memory_space<vmem>>, %arg3: memref<1x1x8x128xf32, #tpu.memory_space<vmem>>) attributes {dimension_semantics = [#tpu.dimension_semantics<parallel>], iteration_bounds = array<i64: 2>, scalar_prefetch = 0 : i64, scratch_operands = 0 : i64, tpu.core_type = #tpu.core_type<tc>, window_params = [{transform_indices = @transform_0, window_bounds = array<i64: 1, 16, 128>}, {transform_indices = @transform_1, window_bounds = array<i64: 1, 16, 128>}, {transform_indices = @transform_2, window_bounds = array<i64: 1, 1, 8, 128>}]} {
    %c0 = arith.constant 0 : index
    %c0_0 = arith.constant 0 : index
    %c0_1 = arith.constant 0 : index
    %0 = vector.load %arg1[%c0, %c0_0, %c0_1] : memref<1x16x128xf32, #tpu.memory_space<vmem>>, vector<1x16x128xf32>
    %1 = vector.shape_cast %0 : vector<1x16x128xf32> to vector<16x128xf32>
    %c0_2 = arith.constant 0 : index
    %c0_3 = arith.constant 0 : index
    %c0_4 = arith.constant 0 : index
    %2 = vector.load %arg2[%c0_2, %c0_3, %c0_4] : memref<1x16x128xf32, #tpu.memory_space<vmem>>, vector<1x16x128xf32>
    %3 = vector.shape_cast %2 : vector<1x16x128xf32> to vector<16x128xf32>
    %4 = tpu.iota {dimensions = array<i32: 0>} : vector<16x128xi32>
    %5 = tpu.iota {dimensions = array<i32: 1>} : vector<16x128xi32>
    %c0_i32 = arith.constant 0 : i32
    %6 = vector.broadcast %c0_i32 : i32 to vector<16x128xi32>
    %7 = arith.cmpi eq, %4, %6 : vector<16x128xi32>
    %c15_i32 = arith.constant 15 : i32
    %8 = vector.broadcast %c15_i32 : i32 to vector<16x128xi32>
    %9 = arith.cmpi eq, %4, %8 : vector<16x128xi32>
    %c0_i32_5 = arith.constant 0 : i32
    %10 = vector.broadcast %c0_i32_5 : i32 to vector<16x128xi32>
    %11 = arith.cmpi eq, %5, %10 : vector<16x128xi32>
    %c127_i32 = arith.constant 127 : i32
    %12 = vector.broadcast %c127_i32 : i32 to vector<16x128xi32>
    %13 = arith.cmpi eq, %5, %12 : vector<16x128xi32>
    %c1_i32 = arith.constant 1 : i32
    %14 = tpu.dynamic_rotate %1 by %c1_i32 dim 0 : vector<16x128xf32>, i32 -> vector<16x128xf32>
    %cst = arith.constant 0.000000e+00 : f32
    %15 = vector.broadcast %cst : f32 to vector<16x128xf32>
    %16 = arith.select %7, %15, %14 : vector<16x128xi1>, vector<16x128xf32>
    %cst_6 = arith.constant 2.000000e+00 : f32
    %17 = vector.broadcast %cst_6 : f32 to vector<16x128xf32>
    %18 = arith.mulf %17, %1 : vector<16x128xf32>
    %19 = arith.addf %16, %18 : vector<16x128xf32>
    %c15_i32_7 = arith.constant 15 : i32
    %20 = tpu.dynamic_rotate %1 by %c15_i32_7 dim 0 : vector<16x128xf32>, i32 -> vector<16x128xf32>
    %cst_8 = arith.constant 0.000000e+00 : f32
    %21 = vector.broadcast %cst_8 : f32 to vector<16x128xf32>
    %22 = arith.select %9, %21, %20 : vector<16x128xi1>, vector<16x128xf32>
    %23 = arith.addf %19, %22 : vector<16x128xf32>
    %c1_i32_9 = arith.constant 1 : i32
    %24 = tpu.dynamic_rotate %23 by %c1_i32_9 dim 1 : vector<16x128xf32>, i32 -> vector<16x128xf32>
    %cst_10 = arith.constant 0.000000e+00 : f32
    %25 = vector.broadcast %cst_10 : f32 to vector<16x128xf32>
    %26 = arith.select %11, %25, %24 : vector<16x128xi1>, vector<16x128xf32>
    %c127_i32_11 = arith.constant 127 : i32
    %27 = tpu.dynamic_rotate %23 by %c127_i32_11 dim 1 : vector<16x128xf32>, i32 -> vector<16x128xf32>
    %cst_12 = arith.constant 0.000000e+00 : f32
    %28 = vector.broadcast %cst_12 : f32 to vector<16x128xf32>
    %29 = arith.select %13, %28, %27 : vector<16x128xi1>, vector<16x128xf32>
    %30 = arith.subf %26, %29 : vector<16x128xf32>
    %c1_i32_13 = arith.constant 1 : i32
    %31 = tpu.dynamic_rotate %3 by %c1_i32_13 dim 0 : vector<16x128xf32>, i32 -> vector<16x128xf32>
    %cst_14 = arith.constant 0.000000e+00 : f32
    %32 = vector.broadcast %cst_14 : f32 to vector<16x128xf32>
    %33 = arith.select %7, %32, %31 : vector<16x128xi1>, vector<16x128xf32>
    %cst_15 = arith.constant 2.000000e+00 : f32
    %34 = vector.broadcast %cst_15 : f32 to vector<16x128xf32>
    %35 = arith.mulf %34, %3 : vector<16x128xf32>
    %36 = arith.addf %33, %35 : vector<16x128xf32>
    %c15_i32_16 = arith.constant 15 : i32
    %37 = tpu.dynamic_rotate %3 by %c15_i32_16 dim 0 : vector<16x128xf32>, i32 -> vector<16x128xf32>
    %cst_17 = arith.constant 0.000000e+00 : f32
    %38 = vector.broadcast %cst_17 : f32 to vector<16x128xf32>
    %39 = arith.select %9, %38, %37 : vector<16x128xi1>, vector<16x128xf32>
    %40 = arith.addf %36, %39 : vector<16x128xf32>
    %c1_i32_18 = arith.constant 1 : i32
    %41 = tpu.dynamic_rotate %40 by %c1_i32_18 dim 1 : vector<16x128xf32>, i32 -> vector<16x128xf32>
    %cst_19 = arith.constant 0.000000e+00 : f32
    %42 = vector.broadcast %cst_19 : f32 to vector<16x128xf32>
    %43 = arith.select %11, %42, %41 : vector<16x128xi1>, vector<16x128xf32>
    %c127_i32_20 = arith.constant 127 : i32
    %44 = tpu.dynamic_rotate %40 by %c127_i32_20 dim 1 : vector<16x128xf32>, i32 -> vector<16x128xf32>
    %cst_21 = arith.constant 0.000000e+00 : f32
    %45 = vector.broadcast %cst_21 : f32 to vector<16x128xf32>
    %46 = arith.select %13, %45, %44 : vector<16x128xi1>, vector<16x128xf32>
    %47 = arith.subf %43, %46 : vector<16x128xf32>
    %48 = arith.subf %1, %3 : vector<16x128xf32>
    %49 = math.absf %48 : vector<16x128xf32>
    %cst_22 = arith.constant 5.000000e-01 : f32
    %50 = vector.broadcast %cst_22 : f32 to vector<16x128xf32>
    %51 = arith.addf %49, %50 : vector<16x128xf32>
    %52 = arith.subf %30, %47 : vector<16x128xf32>
    %53 = math.absf %52 : vector<16x128xf32>
    %cst_23 = arith.constant 5.000000e-01 : f32
    %54 = vector.broadcast %cst_23 : f32 to vector<16x128xf32>
    %55 = arith.addf %53, %54 : vector<16x128xf32>
    %56 = arith.mulf %51, %55 : vector<16x128xf32>
    %57 = arith.mulf %47, %30 : vector<16x128xf32>
    %cst_24 = arith.constant 1.000000e+00 : f32
    %58 = vector.broadcast %cst_24 : f32 to vector<16x128xf32>
    %59 = arith.addf %57, %58 : vector<16x128xf32>
    %60 = arith.mulf %47, %47 : vector<16x128xf32>
    %cst_25 = arith.constant 1.000000e+00 : f32
    %61 = vector.broadcast %cst_25 : f32 to vector<16x128xf32>
    %62 = arith.addf %60, %61 : vector<16x128xf32>
    %63 = arith.mulf %30, %30 : vector<16x128xf32>
    %cst_26 = arith.constant 1.000000e+00 : f32
    %64 = vector.broadcast %cst_26 : f32 to vector<16x128xf32>
    %65 = arith.addf %63, %64 : vector<16x128xf32>
    %c1_i32_27 = arith.constant 1 : i32
    %66 = tpu.dynamic_rotate %1 by %c1_i32_27 dim 1 : vector<16x128xf32>, i32 -> vector<16x128xf32>
    %cst_28 = arith.constant 0.000000e+00 : f32
    %67 = vector.broadcast %cst_28 : f32 to vector<16x128xf32>
    %68 = arith.select %11, %67, %66 : vector<16x128xi1>, vector<16x128xf32>
    %cst_29 = arith.constant 2.000000e+00 : f32
    %69 = vector.broadcast %cst_29 : f32 to vector<16x128xf32>
    %70 = arith.mulf %69, %1 : vector<16x128xf32>
    %71 = arith.addf %68, %70 : vector<16x128xf32>
    %c127_i32_30 = arith.constant 127 : i32
    %72 = tpu.dynamic_rotate %1 by %c127_i32_30 dim 1 : vector<16x128xf32>, i32 -> vector<16x128xf32>
    %cst_31 = arith.constant 0.000000e+00 : f32
    %73 = vector.broadcast %cst_31 : f32 to vector<16x128xf32>
    %74 = arith.select %13, %73, %72 : vector<16x128xi1>, vector<16x128xf32>
    %75 = arith.addf %71, %74 : vector<16x128xf32>
    %c1_i32_32 = arith.constant 1 : i32
    %76 = tpu.dynamic_rotate %75 by %c1_i32_32 dim 0 : vector<16x128xf32>, i32 -> vector<16x128xf32>
    %cst_33 = arith.constant 0.000000e+00 : f32
    %77 = vector.broadcast %cst_33 : f32 to vector<16x128xf32>
    %78 = arith.select %7, %77, %76 : vector<16x128xi1>, vector<16x128xf32>
    %c15_i32_34 = arith.constant 15 : i32
    %79 = tpu.dynamic_rotate %75 by %c15_i32_34 dim 0 : vector<16x128xf32>, i32 -> vector<16x128xf32>
    %cst_35 = arith.constant 0.000000e+00 : f32
    %80 = vector.broadcast %cst_35 : f32 to vector<16x128xf32>
    %81 = arith.select %9, %80, %79 : vector<16x128xi1>, vector<16x128xf32>
    %82 = arith.subf %78, %81 : vector<16x128xf32>
    %c1_i32_36 = arith.constant 1 : i32
    %83 = tpu.dynamic_rotate %3 by %c1_i32_36 dim 1 : vector<16x128xf32>, i32 -> vector<16x128xf32>
    %cst_37 = arith.constant 0.000000e+00 : f32
    %84 = vector.broadcast %cst_37 : f32 to vector<16x128xf32>
    %85 = arith.select %11, %84, %83 : vector<16x128xi1>, vector<16x128xf32>
    %cst_38 = arith.constant 2.000000e+00 : f32
    %86 = vector.broadcast %cst_38 : f32 to vector<16x128xf32>
    %87 = arith.mulf %86, %3 : vector<16x128xf32>
    %88 = arith.addf %85, %87 : vector<16x128xf32>
    %c127_i32_39 = arith.constant 127 : i32
    %89 = tpu.dynamic_rotate %3 by %c127_i32_39 dim 1 : vector<16x128xf32>, i32 -> vector<16x128xf32>
    %cst_40 = arith.constant 0.000000e+00 : f32
    %90 = vector.broadcast %cst_40 : f32 to vector<16x128xf32>
    %91 = arith.select %13, %90, %89 : vector<16x128xi1>, vector<16x128xf32>
    %92 = arith.addf %88, %91 : vector<16x128xf32>
    %c1_i32_41 = arith.constant 1 : i32
    %93 = tpu.dynamic_rotate %92 by %c1_i32_41 dim 0 : vector<16x128xf32>, i32 -> vector<16x128xf32>
    %cst_42 = arith.constant 0.000000e+00 : f32
    %94 = vector.broadcast %cst_42 : f32 to vector<16x128xf32>
    %95 = arith.select %7, %94, %93 : vector<16x128xi1>, vector<16x128xf32>
    %c15_i32_43 = arith.constant 15 : i32
    %96 = tpu.dynamic_rotate %92 by %c15_i32_43 dim 0 : vector<16x128xf32>, i32 -> vector<16x128xf32>
    %cst_44 = arith.constant 0.000000e+00 : f32
    %97 = vector.broadcast %cst_44 : f32 to vector<16x128xf32>
    %98 = arith.select %9, %97, %96 : vector<16x128xi1>, vector<16x128xf32>
    %99 = arith.subf %95, %98 : vector<16x128xf32>
    %100 = arith.subf %82, %99 : vector<16x128xf32>
    %101 = math.absf %100 : vector<16x128xf32>
    %cst_45 = arith.constant 5.000000e-01 : f32
    %102 = vector.broadcast %cst_45 : f32 to vector<16x128xf32>
    %103 = arith.addf %101, %102 : vector<16x128xf32>
    %104 = arith.mulf %56, %103 : vector<16x128xf32>
    %105 = arith.mulf %99, %82 : vector<16x128xf32>
    %106 = arith.addf %59, %105 : vector<16x128xf32>
    %107 = arith.mulf %99, %99 : vector<16x128xf32>
    %108 = arith.addf %62, %107 : vector<16x128xf32>
    %109 = arith.mulf %82, %82 : vector<16x128xf32>
    %110 = arith.addf %65, %109 : vector<16x128xf32>
    %111 = math.log %104 : vector<16x128xf32>
    %112 = arith.mulf %108, %110 : vector<16x128xf32>
    %113 = math.rsqrt %112 : vector<16x128xf32>
    %114 = arith.mulf %106, %113 : vector<16x128xf32>
    %cst_46 = arith.constant 1.000000e+00 : f32
    %115 = vector.broadcast %cst_46 : f32 to vector<16x128xf32>
    %116 = arith.subf %115, %114 : vector<16x128xf32>
    %117 = math.absf %116 : vector<16x128xf32>
    %118 = arith.addf %111, %117 : vector<16x128xf32>
    %119 = vector.shape_cast %118 : vector<16x128xf32> to vector<1x16x128xf32>
    %cst_47 = arith.constant dense<0.000000e+00> : vector<1xf32>
    %120 = vector.multi_reduction <add>, %119, %cst_47 [1, 2] : vector<1x16x128xf32> to vector<1xf32>
    %121 = vector.shape_cast %120 : vector<1xf32> to vector<1x1x1xf32>
    %122 = vector.extract %121[0, 0, 0] : f32 from vector<1x1x1xf32>
    %123 = tpu.iota {dimensions = array<i32: 2>} : vector<1x1x8x128xi32>
    %124 = tpu.iota {dimensions = array<i32: 3>} : vector<1x1x8x128xi32>
    %c0_i32_48 = arith.constant 0 : i32
    %125 = vector.broadcast %c0_i32_48 : i32 to vector<1x1x8x128xi32>
    %126 = arith.cmpi eq, %123, %125 : vector<1x1x8x128xi32>
    %c0_i32_49 = arith.constant 0 : i32
    %127 = vector.broadcast %c0_i32_49 : i32 to vector<1x1x8x128xi32>
    %128 = arith.cmpi eq, %124, %127 : vector<1x1x8x128xi32>
    %129 = arith.andi %126, %128 : vector<1x1x8x128xi1>
    %c0_i32_50 = arith.constant 0 : i32
    %130 = vector.broadcast %c0_i32_50 : i32 to vector<1x1x8x128xi32>
    %131 = arith.cmpi eq, %123, %130 : vector<1x1x8x128xi32>
    %c1_i32_51 = arith.constant 1 : i32
    %132 = vector.broadcast %c1_i32_51 : i32 to vector<1x1x8x128xi32>
    %133 = arith.cmpi eq, %124, %132 : vector<1x1x8x128xi32>
    %134 = arith.andi %131, %133 : vector<1x1x8x128xi1>
    %cst_52 = arith.constant 2.048000e+03 : f32
    %cst_53 = arith.constant 0.000000e+00 : f32
    %135 = vector.broadcast %cst_52 : f32 to vector<1x1x8x128xf32>
    %136 = vector.broadcast %cst_53 : f32 to vector<1x1x8x128xf32>
    %137 = arith.select %134, %135, %136 : vector<1x1x8x128xi1>, vector<1x1x8x128xf32>
    %138 = vector.broadcast %122 : f32 to vector<1x1x8x128xf32>
    %139 = arith.select %129, %138, %137 : vector<1x1x8x128xi1>, vector<1x1x8x128xf32>
    %c0_54 = arith.constant 0 : index
    %c0_55 = arith.constant 0 : index
    %c0_56 = arith.constant 0 : index
    %c0_57 = arith.constant 0 : index
    %140 = vector.load %arg3[%c0_54, %c0_55, %c0_56, %c0_57] : memref<1x1x8x128xf32, #tpu.memory_space<vmem>>, vector<1x1x8x128xf32>
    tpu.vector_store %arg3[%c0_54, %c0_55, %c0_56, %c0_57], %139 {strides = array<i32>} : memref<1x1x8x128xf32, #tpu.memory_space<vmem>>, vector<1x1x8x128xf32>,
    return
  }
  func.func @transform_0(%arg0: i32) -> (i32, i32, i32) {
    %c0_i32 = arith.constant 0 : i32
    %c0_i32_0 = arith.constant 0 : i32
    %c0_i32_1 = arith.constant 0 : i32
    return %arg0, %c0_i32, %c0_i32_0 : i32, i32, i32
  }
  func.func @transform_1(%arg0: i32) -> (i32, i32, i32) {
    %c0_i32 = arith.constant 0 : i32
    %c0_i32_0 = arith.constant 0 : i32
    %c0_i32_1 = arith.constant 0 : i32
    return %arg0, %c0_i32, %c0_i32_0 : i32, i32, i32
  }
  func.func @transform_2(%arg0: i32) -> (i32, i32, i32, i32) {
    %c0_i32 = arith.constant 0 : i32
    %c0_i32_0 = arith.constant 0 : i32
    %c0_i32_1 = arith.constant 0 : i32
    %c0_i32_2 = arith.constant 0 : i32
    return %arg0, %c0_i32, %c0_i32_0, %c0_i32_1 : i32, i32, i32, i32
  }
}

</mosaic_0001>

<llo_original>
// kernel: tpu_custom_call.1
$region0: #{tpu_custom_call.1}
  #allocation0 [shape = 'u32[]', space=smem, size = 0x4, offset = 0x4, fixed_abs, tag = 'smem constant byte address 0x4 - core index']
  #allocation1 [shape = 'u32[144,128]{1,0:T(1,128)}', space=vmem, size = 0x12000, scoped, tag = 'internal scratch']
  %s0 = inlined_call_operand.hbm [shape: f32[2,16,128], index: 0, kind: input, shape index: {}]
  %s1 = inlined_call_operand.hbm [shape: f32[2,16,128], index: 1, kind: input, shape index: {}]
  %s2 = inlined_call_operand.hbm [shape: f32[2,1,8,128], index: 2, kind: output, shape index: {}]
  %s3 = sld [smem:[#allocation0]]
  $region49: #{tpu_custom_call.1} parent=0
    _
  %s5 = ssub.s32 1, %s3
  %s6 = scalar_select 0, %s5, %s3
  $region1: #{tpu_custom_call.1} parent=0
    #allocation2 [shape = 'u8[16384]{0}', space=vmem, size = 0x4000, scoped, tag = 'input window, operand 0']
    #allocation3 [shape = 's32[2]{0}', space=sflag, size = 0x8, scoped, tag = 'scoped memory for tpu_custom_call.1']
    #allocation4 [shape = 's32[2]{0}', space=sflag, size = 0x8, scoped, tag = 'scoped memory for tpu_custom_call.1']
    #allocation5 [shape = 'u8[16384]{0}', space=vmem, size = 0x4000, scoped, tag = 'input window, operand 1']
    #allocation6 [shape = 's32[2]{0}', space=sflag, size = 0x8, scoped, tag = 'scoped memory for tpu_custom_call.1']
    #allocation7 [shape = 'u8[8192]{0}', space=vmem, size = 0x2000, scoped, tag = 'output window, operand 0']
    %7 = vsyncpa [#allocation3], 0
    %s8 = scalar_lea.sflag [#allocation3], 1
    %9 = vsyncpa %s8, 0
    %10 = vsyncpa [#allocation6], 0
    %s11 = scalar_lea.sflag [#allocation6], 1
    %12 = vsyncpa %s11, 0
    %13 = vsyncpa [#allocation4], 0
    %s14 = scalar_lea.sflag [#allocation4], 1
    %15 = vsyncpa %s14, 0
    loop: start=0, step=1, limit=4
    $region2: #{tpu_custom_call.1} parent=1 // loop_pre_header
      _
    $region3: #{tpu_custom_call.1} parent=1 // loop_header
      %s17 = sphi 0, %s21
      %p18 = scmp.ge.s32.totalorder %s17, 4
      %s27 = sphi 0, %s29
      %s30 = sphi 0, %s27
      %s31 = sphi 0, %s30
      %s47 = sphi 0, %s31
      %s53 = sphi 0, %s55
      %s56 = sphi 0, %s53
      %s57 = sphi 0, %s56
      %s73 = sphi 0, %s57
      %s79 = sphi 0, %s81
      %s82 = sphi 0, %s79
      %s83 = sphi 0, %s82
      %s99 = sphi 0, %s83
    $region4: #{tpu_custom_call.1} parent=1 // loop_header_branch
      %20 = sbr.rel (%p18) target = $region8
    $region5: #{tpu_custom_call.1} parent=1 // loop_body
      %s22 = ssub.s32 %s17, 1
      %s23 = ssub.s32 %s17, 2
      %s24 = sadd.s32 %s17, 1
      %s25 = ssub.s32 %s17, %s24
      %p26 = scmp.eq.s32.totalorder %s25, 0
      %s28 = sadd.s32 %s27, 1
      %s29 = scalar_select %p26, %s27, %s28
      %p32 = pneg %p26
      %p33 = scmp.eq.s32.totalorder %s17, 1
      %p34 = por %p32, %p33
      %p35 = scmp.ne.s32.totalorder %s27, %s30
      %p36 = scmp.eq.s32.totalorder %s17, 0
      %p37 = por %p35, %p36
      %p38 = scmp.ne.s32.totalorder %s27, %s30
      %p39 = scmp.eq.s32.totalorder %s22, 1
      %p40 = por %p38, %p39
      %p41 = scmp.ne.s32.totalorder %s30, %s31
      %p42 = scmp.eq.s32.totalorder %s22, 0
      %p43 = por %p41, %p42
      %p44 = scmp.ne.s32.totalorder %s30, %s31
      %p45 = scmp.eq.s32.totalorder %s23, 1
      %p46 = por %p44, %p45
      %p48 = scmp.ne.s32.totalorder %s31, %s47
      %p49 = scmp.eq.s32.totalorder %s23, 0
      %p50 = por %p48, %p49
      %s51 = ssub.s32 %s17, %s24
      %p52 = scmp.eq.s32.totalorder %s51, 0
      %s54 = sadd.s32 %s53, 1
      %s55 = scalar_select %p52, %s53, %s54
      %p58 = pneg %p52
      %p59 = scmp.eq.s32.totalorder %s17, 1
      %p60 = por %p58, %p59
      %p61 = scmp.ne.s32.totalorder %s53, %s56
      %p62 = scmp.eq.s32.totalorder %s17, 0
      %p63 = por %p61, %p62
      %p64 = scmp.ne.s32.totalorder %s53, %s56
      %p65 = scmp.eq.s32.totalorder %s22, 1
      %p66 = por %p64, %p65
      %p67 = scmp.ne.s32.totalorder %s56, %s57
      %p68 = scmp.eq.s32.totalorder %s22, 0
      %p69 = por %p67, %p68
      %p70 = scmp.ne.s32.totalorder %s56, %s57
      %p71 = scmp.eq.s32.totalorder %s23, 1
      %p72 = por %p70, %p71
      %p74 = scmp.ne.s32.totalorder %s57, %s73
      %p75 = scmp.eq.s32.totalorder %s23, 0
      %p76 = por %p74, %p75
      %s77 = ssub.s32 %s17, %s24
      %p78 = scmp.eq.s32.totalorder %s77, 0
      %s80 = sadd.s32 %s79, 1
      %s81 = scalar_select %p78, %s79, %s80
      %p84 = pneg %p78
      %p85 = scmp.eq.s32.totalorder %s17, 1
      %p86 = por %p84, %p85
      %p87 = scmp.ne.s32.totalorder %s79, %s82
      %p88 = scmp.eq.s32.totalorder %s17, 0
      %p89 = por %p87, %p88
      %p90 = scmp.ne.s32.totalorder %s79, %s82
      %p91 = scmp.eq.s32.totalorder %s22, 1
      %p92 = por %p90, %p91
      %p93 = scmp.ne.s32.totalorder %s82, %s83
      %p94 = scmp.eq.s32.totalorder %s22, 0
      %p95 = por %p93, %p94
      %p96 = scmp.ne.s32.totalorder %s82, %s83
      %p97 = scmp.eq.s32.totalorder %s23, 1
      %p98 = por %p96, %p97
      %p100 = scmp.ne.s32.totalorder %s83, %s99
      %p101 = scmp.eq.s32.totalorder %s23, 0
      %p102 = por %p100, %p101
      %p103 = scmp.le.s32.totalorder 1, %s17
      %p104 = scmp.lt.s32.totalorder %s17, 3
      %p105 = pnand %p103, %p104
      %p106 = pneg %p105
      // Predicated region
      $region9: #{tpu_custom_call.1} parent=5 // pred_check
        _
      $region10: #{tpu_custom_call.1} parent=5 // pred_check_branch
        %108 = sbr.rel (%p105) target = $region12
      $region11: #{tpu_custom_call.1} parent=5 // pred_region
        %s109 = ssub.s32 %s17, 1
      $region12: #{tpu_custom_call.1} parent=5 // pred_fallthru
        _
      %p110 = scmp.lt.s32.totalorder %s17, 2
      // Predicated region
      $region13: #{tpu_custom_call.1} parent=5 // pred_check
        %p111 = pneg %p110
      $region14: #{tpu_custom_call.1} parent=5 // pred_check_branch
        %113 = sbr.rel (%p111) target = $region16
      $region15: #{tpu_custom_call.1} parent=5 // pred_region
        // Predicated region
        $region17: #{tpu_custom_call.1} parent=15 // pred_check
          %p114 = pneg %p37
        $region18: #{tpu_custom_call.1} parent=15 // pred_check_branch
          %116 = sbr.rel (%p114) target = $region20
        $region19: #{tpu_custom_call.1} parent=15 // pred_region
          %s117 = sand.u32 %s27, 1
          %s118 = scalar_lea.sflag [#allocation3], %s117
          %s119 = sand.u32 %s27, 1
          %s120 = smul.addr %s119, 16
          %s121 = scalar_lea.vmem [#allocation2], %s120
          %s123 = ssub.s32 256, 256
          %124 = vsyncadd %s118, %s123
          %s125 = smul.addr %s17, 2
          %s126 = smul.addr %s125, 128
          %s127 = scalar_lea.hbm %s0, %s126
          %s128 = sshll.u32 %s121, 4
          %s129 = int_to_ptr.vmem [resolvable:$true] %s128
          %134 = dma.hbm_to_vmem [thread:$0]  %s127, 256, %s129, %s118, 128, 128, 8
        $region20: #{tpu_custom_call.1} parent=15 // pred_fallthru
          _
        // Predicated region
        $region21: #{tpu_custom_call.1} parent=15 // pred_check
          %p135 = pneg %p63
        $region22: #{tpu_custom_call.1} parent=15 // pred_check_branch
          %137 = sbr.rel (%p135) target = $region24
        $region23: #{tpu_custom_call.1} parent=15 // pred_region
          %s138 = sand.u32 %s53, 1
          %s139 = scalar_lea.sflag [#allocation6], %s138
          %s140 = sand.u32 %s53, 1
          %s141 = smul.addr %s140, 16
          %s142 = scalar_lea.vmem [#allocation5], %s141
          %s144 = ssub.s32 256, 256
          %145 = vsyncadd %s139, %s144
          %s146 = smul.addr %s17, 2
          %s147 = smul.addr %s146, 128
          %s148 = scalar_lea.hbm %s1, %s147
          %s149 = sshll.u32 %s142, 4
          %s150 = int_to_ptr.vmem [resolvable:$true] %s149
          %155 = dma.hbm_to_vmem [thread:$0]  %s148, 256, %s150, %s139, 128, 128, 8
        $region24: #{tpu_custom_call.1} parent=15 // pred_fallthru
          _
      $region16: #{tpu_custom_call.1} parent=5 // pred_fallthru
        _
      %p156 = scmp.le.s32.totalorder 1, %s17
      %p157 = scmp.lt.s32.totalorder %s17, 3
      %p158 = pnand %p156, %p157
      %p159 = pneg %p158
      // Predicated region
      $region25: #{tpu_custom_call.1} parent=5 // pred_check
        _
      $region26: #{tpu_custom_call.1} parent=5 // pred_check_branch
        %161 = sbr.rel (%p158) target = $region28
      $region27: #{tpu_custom_call.1} parent=5 // pred_region
        %s162 = ssub.s32 %s17, 1
        %s163 = sand.u32 %s30, 1
        %s164 = scalar_lea.sflag [#allocation3], %s163
        %s165 = sand.u32 %s30, 1
        %s166 = smul.addr %s165, 16
        %s167 = scalar_lea.vmem [#allocation2], %s166
        // Predicated region
        $region29: #{tpu_custom_call.1} parent=27 // pred_check
          %p168 = pneg %p43
        $region30: #{tpu_custom_call.1} parent=27 // pred_check_branch
          %170 = sbr.rel (%p168) target = $region32
        $region31: #{tpu_custom_call.1} parent=27 // pred_region
          %171 = dma.done %s164, 256
        $region32: #{tpu_custom_call.1} parent=27 // pred_fallthru
          _
        %s172 = sand.u32 %s56, 1
        %s173 = scalar_lea.sflag [#allocation6], %s172
        %s174 = sand.u32 %s56, 1
        %s175 = smul.addr %s174, 16
        %s176 = scalar_lea.vmem [#allocation5], %s175
        // Predicated region
        $region33: #{tpu_custom_call.1} parent=27 // pred_check
          %p177 = pneg %p69
        $region34: #{tpu_custom_call.1} parent=27 // pred_check_branch
          %179 = sbr.rel (%p177) target = $region36
        $region35: #{tpu_custom_call.1} parent=27 // pred_region
          %180 = dma.done %s173, 256
        $region36: #{tpu_custom_call.1} parent=27 // pred_fallthru
          _
        %s181 = sand.u32 %s30, 1
        %s182 = scalar_lea.sflag [#allocation3], %s181
        %s183 = sand.u32 %s30, 1
        %s184 = smul.addr %s183, 16
        %s185 = scalar_lea.vmem [#allocation2], %s184
        %p186 = pneg %p43
        %p187 = pneg %p40
        %s188 = sand.u32 %s56, 1
        %s189 = scalar_lea.sflag [#allocation6], %s188
        %s190 = sand.u32 %s56, 1
        %s191 = smul.addr %s190, 16
        %s192 = scalar_lea.vmem [#allocation5], %s191
        %p193 = pneg %p69
        %p194 = pneg %p66
        %p195 = pneg %p95
        %p196 = pneg %p92
        %s197 = sand.u32 %s82, 1
        %s198 = scalar_lea.sflag [#allocation4], %s197
        %s199 = sand.u32 %s82, 1
        %s200 = smul.addr %s199, 8
        %s201 = scalar_lea.vmem [#allocation7], %s200
        %v202 = vld [vmem:[%s167] sm:$0xff]
        %v203 = vld [vmem:[%s167 + $0x8] sm:$0xff]
        %v204 = vld [vmem:[%s176] sm:$0xff]
        %v205 = vld [vmem:[%s176 + $0x8] sm:$0xff]
        %v206 = vlaneseq
        %v207 = vshrl.u32 %v206, 7
        %v208 = vadd.s32 %v207, 8
        %v209 = vlaneseq
        %v210 = vand.u32 %v209, 127
        %vm211 = vcmp.eq.s32.totalorder %v207, 0
        %vm212 = vcmp.eq.s32.totalorder %v208, 0
        %vm213 = vcmp.eq.s32.totalorder %v207, 15
        %vm214 = vcmp.eq.s32.totalorder %v208, 15
        %vm215 = vcmp.eq.s32.totalorder %v210, 0
        %vm216 = vcmp.eq.s32.totalorder %v210, 127
        %v217 = vrot.slane %v202, 7
        %v218 = vrot.slane %v203, 7
        %vm219 = vcmp.lt.s32.totalorder %v207, 1
        %v220 = vsel %vm219, %v217, %v218
        %v221 = vsel %vm219, %v218, %v217
        %v222 = vsel %vm211, 0.0, %v221
        %v223 = vsel %vm212, 0.0, %v220
        %v224 = vmul.f32 %v202, 2.0
        %v225 = vmul.f32 %v203, 2.0
        %v226 = vadd.f32 %v222, %v224
        %v227 = vadd.f32 %v223, %v225
        %v228 = vrot.slane %v202, 1
        %v229 = vrot.slane %v203, 1
        %vm230 = vcmp.lt.s32.totalorder %v207, 7
        %v231 = vsel %vm230, %v228, %v229
        %v232 = vsel %vm230, %v229, %v228
        %v233 = vsel %vm213, 0.0, %v231
        %v234 = vsel %vm214, 0.0, %v232
        %v235 = vadd.f32 %v226, %v233
        %v236 = vadd.f32 %v227, %v234
        %237 = vrot.lane.b32.xlu0 %v235, 1
        %v238 = vpop.permute.xlu0 %237
        %239 = vrot.lane.b32.xlu0 %v236, 1
        %v240 = vpop.permute.xlu0 %239
        %v241 = vsel %vm215, 0.0, %v238
        %v242 = vsel %vm215, 0.0, %v240
        %243 = vrot.lane.b32.xlu0 %v235, 127
        %v244 = vpop.permute.xlu0 %243
        %245 = vrot.lane.b32.xlu0 %v236, 127
        %v246 = vpop.permute.xlu0 %245
        %v247 = vsel %vm216, 0.0, %v244
        %v248 = vsel %vm216, 0.0, %v246
        %v249 = vsub.f32 %v241, %v247
        %v250 = vsub.f32 %v242, %v248
        %v251 = vrot.slane %v204, 7
        %v252 = vrot.slane %v205, 7
        %v253 = vsel %vm219, %v251, %v252
        %v254 = vsel %vm219, %v252, %v251
        %v255 = vsel %vm211, 0.0, %v254
        %v256 = vsel %vm212, 0.0, %v253
        %v257 = vmul.f32 %v204, 2.0
        %v258 = vmul.f32 %v205, 2.0
        %v259 = vadd.f32 %v255, %v257
        %v260 = vadd.f32 %v256, %v258
        %v261 = vrot.slane %v204, 1
        %v262 = vrot.slane %v205, 1
        %v263 = vsel %vm230, %v261, %v262
        %v264 = vsel %vm230, %v262, %v261
        %v265 = vsel %vm213, 0.0, %v263
        %v266 = vsel %vm214, 0.0, %v264
        %v267 = vadd.f32 %v259, %v265
        %v268 = vadd.f32 %v260, %v266
        %269 = vrot.lane.b32.xlu0 %v267, 1
        %v270 = vpop.permute.xlu0 %269
        %271 = vrot.lane.b32.xlu0 %v268, 1
        %v272 = vpop.permute.xlu0 %271
        %v273 = vsel %vm215, 0.0, %v270
        %v274 = vsel %vm215, 0.0, %v272
        %275 = vrot.lane.b32.xlu0 %v267, 127
        %v276 = vpop.permute.xlu0 %275
        %277 = vrot.lane.b32.xlu0 %v268, 127
        %v278 = vpop.permute.xlu0 %277
        %v279 = vsel %vm216, 0.0, %v276
        %v280 = vsel %vm216, 0.0, %v278
        %v281 = vsub.f32 %v273, %v279
        %v282 = vsub.f32 %v274, %v280
        %v283 = vsub.f32 %v202, %v204
        %v284 = vsub.f32 %v203, %v205
        %v285 = vand.u32 2147483647, %v283
        %v286 = vand.u32 2147483647, %v284
        %v287 = vadd.f32 %v285, 0.5
        %v288 = vadd.f32 %v286, 0.5
        %v289 = vsub.f32 %v249, %v281
        %v290 = vsub.f32 %v250, %v282
        %v291 = vand.u32 2147483647, %v289
        %v292 = vand.u32 2147483647, %v290
        %v293 = vadd.f32 %v291, 0.5
        %v294 = vadd.f32 %v292, 0.5
        %v295 = vmul.f32 %v287, %v293
        %v296 = vmul.f32 %v288, %v294
        %v297 = vmul.f32 %v281, %v249
        %v298 = vmul.f32 %v282, %v250
        %v299 = vadd.f32 %v297, 1.0
        %v300 = vadd.f32 %v298, 1.0
        %v301 = vmul.f32 %v281, %v281
        %v302 = vmul.f32 %v282, %v282
        %v303 = vadd.f32 %v301, 1.0
        %v304 = vadd.f32 %v302, 1.0
        %v305 = vmul.f32 %v249, %v249
        %v306 = vmul.f32 %v250, %v250
        %v307 = vadd.f32 %v305, 1.0
        %v308 = vadd.f32 %v306, 1.0
        %309 = vrot.lane.b32.xlu0 %v202, 1
        %v310 = vpop.permute.xlu0 %309
        %311 = vrot.lane.b32.xlu0 %v203, 1
        %v312 = vpop.permute.xlu0 %311
        %v313 = vsel %vm215, 0.0, %v310
        %v314 = vsel %vm215, 0.0, %v312
        %v315 = vadd.f32 %v313, %v224
        %v316 = vadd.f32 %v314, %v225
        %317 = vrot.lane.b32.xlu0 %v202, 127
        %v318 = vpop.permute.xlu0 %317
        %319 = vrot.lane.b32.xlu0 %v203, 127
        %v320 = vpop.permute.xlu0 %319
        %v321 = vsel %vm216, 0.0, %v318
        %v322 = vsel %vm216, 0.0, %v320
        %v323 = vadd.f32 %v315, %v321
        %v324 = vadd.f32 %v316, %v322
        %v325 = vrot.slane %v323, 7
        %v326 = vrot.slane %v324, 7
        %v327 = vsel %vm219, %v325, %v326
        %v328 = vsel %vm219, %v326, %v325
        %v329 = vsel %vm211, 0.0, %v328
        %v330 = vsel %vm212, 0.0, %v327
        %v331 = vrot.slane %v323, 1
        %v332 = vrot.slane %v324, 1
        %v333 = vsel %vm230, %v331, %v332
        %v334 = vsel %vm230, %v332, %v331
        %v335 = vsel %vm213, 0.0, %v333
        %v336 = vsel %vm214, 0.0, %v334
        %v337 = vsub.f32 %v329, %v335
        %v338 = vsub.f32 %v330, %v336
        %339 = vrot.lane.b32.xlu0 %v204, 1
        %v340 = vpop.permute.xlu0 %339
        %341 = vrot.lane.b32.xlu0 %v205, 1
        %v342 = vpop.permute.xlu0 %341
        %v343 = vsel %vm215, 0.0, %v340
        %v344 = vsel %vm215, 0.0, %v342
        %v345 = vadd.f32 %v343, %v257
        %v346 = vadd.f32 %v344, %v258
        %347 = vrot.lane.b32.xlu0 %v204, 127
        %v348 = vpop.permute.xlu0 %347
        %349 = vrot.lane.b32.xlu0 %v205, 127
        %v350 = vpop.permute.xlu0 %349
        %v351 = vsel %vm216, 0.0, %v348
        %v352 = vsel %vm216, 0.0, %v350
        %v353 = vadd.f32 %v345, %v351
        %v354 = vadd.f32 %v346, %v352
        %v355 = vrot.slane %v353, 7
        %v356 = vrot.slane %v354, 7
        %v357 = vsel %vm219, %v355, %v356
        %v358 = vsel %vm219, %v356, %v355
        %v359 = vsel %vm211, 0.0, %v358
        %v360 = vsel %vm212, 0.0, %v357
        %v361 = vrot.slane %v353, 1
        %v362 = vrot.slane %v354, 1
        %v363 = vsel %vm230, %v361, %v362
        %v364 = vsel %vm230, %v362, %v361
        %v365 = vsel %vm213, 0.0, %v363
        %v366 = vsel %vm214, 0.0, %v364
        %v367 = vsub.f32 %v359, %v365
        %v368 = vsub.f32 %v360, %v366
        %v369 = vsub.f32 %v337, %v367
        %v370 = vsub.f32 %v338, %v368
        %v371 = vand.u32 2147483647, %v369
        %v372 = vand.u32 2147483647, %v370
        %v373 = vadd.f32 %v371, 0.5
        %v374 = vadd.f32 %v372, 0.5
        %v375 = vmul.f32 %v295, %v373
        %v376 = vmul.f32 %v296, %v374
        %v377 = vmul.f32 %v367, %v337
        %v378 = vmul.f32 %v368, %v338
        %v379 = vadd.f32 %v299, %v377
        %v380 = vadd.f32 %v300, %v378
        %v381 = vmul.f32 %v367, %v367
        %v382 = vmul.f32 %v368, %v368
        %v383 = vadd.f32 %v303, %v381
        %v384 = vadd.f32 %v304, %v382
        %v385 = vmul.f32 %v337, %v337
        %v386 = vmul.f32 %v338, %v338
        %v387 = vadd.f32 %v307, %v385
        %v388 = vadd.f32 %v308, %v386
        %v389 = vlog2.pop %v375
        %v390 = vmul.f32 %v389, 0.6931472
        %v391 = vlog2.pop %v376
        %v392 = vmul.f32 %v391, 0.6931472
        %v393 = vmul.f32 %v383, %v387
        %v394 = vmul.f32 %v384, %v388
        %v395 = vrsqrt.pop %v393
        %v396 = vrsqrt.pop %v394
        %v397 = vmul.f32 %v379, %v395
        %v398 = vmul.f32 %v380, %v396
        %v399 = vsub.f32 1.0, %v397
        %v400 = vsub.f32 1.0, %v398
        %v401 = vand.u32 2147483647, %v399
        %v402 = vand.u32 2147483647, %v400
        %v403 = vadd.f32 %v390, %v401
        %v404 = vadd.f32 %v392, %v402
        %v405 = vadd.f32 %v403, %v404
        %406 = vadd.xlane.f32.xlu0 %v405
        %v407 = vpop.xlane.xlu0 %406
        %v408 = vrot.slane %v407, 4
        %v409 = vadd.f32 %v407, %v408
        %v410 = vrot.slane %v409, 2
        %v411 = vadd.f32 %v409, %v410
        %v412 = vrot.slane %v411, 1
        %v413 = vadd.f32 %v411, %v412
        %s414 = vtos %v413
        %vm415 = vmand %vm211, %vm215
        %vm416 = vcmp.eq.s32.totalorder %v210, 1
        %vm417 = vmand %vm211, %vm416
        %v418 = vsel %vm417, 2048.0, 0.0
        %v419 = vstv %s414
        %v420 = vsel %vm415, %v419, %v418
        %421 = vst [vmem:[%s201] sm:$0xff] %v420
        %s422 = sand.u32 %s82, 1
        %s423 = scalar_lea.sflag [#allocation4], %s422
        %s424 = sand.u32 %s82, 1
        %s425 = smul.addr %s424, 8
        %s426 = scalar_lea.vmem [#allocation7], %s425
        // Predicated region
        $region37: #{tpu_custom_call.1} parent=27 // pred_check
          %p427 = pneg %p92
        $region38: #{tpu_custom_call.1} parent=27 // pred_check_branch
          %429 = sbr.rel (%p427) target = $region40
        $region39: #{tpu_custom_call.1} parent=27 // pred_region
          %s431 = ssub.s32 128, 128
          %432 = vsyncadd %s423, %s431
          %s433 = smul.addr %s22, 128
          %s434 = scalar_lea.hbm %s2, %s433
          %s436 = sshll.u32 %s426, 4
          %s437 = int_to_ptr.vmem [resolvable:$true] %s436
          %439 = dma.vmem_to_hbm [thread:$0]  %s437, 128, %s434, %s423
        $region40: #{tpu_custom_call.1} parent=27 // pred_fallthru
          _
      $region28: #{tpu_custom_call.1} parent=5 // pred_fallthru
        _
      %p440 = scmp.le.s32.totalorder 2, %s17
      // Predicated region
      $region41: #{tpu_custom_call.1} parent=5 // pred_check
        %p441 = pneg %p440
      $region42: #{tpu_custom_call.1} parent=5 // pred_check_branch
        %443 = sbr.rel (%p441) target = $region44
      $region43: #{tpu_custom_call.1} parent=5 // pred_region
        %s444 = ssub.s32 %s17, 2
        // Predicated region
        $region45: #{tpu_custom_call.1} parent=43 // pred_check
          %p445 = pneg %p98
        $region46: #{tpu_custom_call.1} parent=43 // pred_check_branch
          %447 = sbr.rel (%p445) target = $region48
        $region47: #{tpu_custom_call.1} parent=43 // pred_region
          %s448 = sand.u32 %s83, 1
          %s449 = scalar_lea.sflag [#allocation4], %s448
          %s450 = sand.u32 %s83, 1
          %s451 = smul.addr %s450, 8
          %s452 = scalar_lea.vmem [#allocation7], %s451
          %453 = dma.done %s449, 128
        $region48: #{tpu_custom_call.1} parent=43 // pred_fallthru
          _
      $region44: #{tpu_custom_call.1} parent=5 // pred_fallthru
        _
    $region6: #{tpu_custom_call.1} parent=1 // loop_footer
      %s21 = sadd.s32 1, %s17
    $region7: #{tpu_custom_call.1} parent=1 // loop_footer_branch
      %16 = sbr.rel target = $region3
    $region8: #{tpu_custom_call.1} parent=1 // loop_exit
      _
    %454 = vsyncpa [#allocation3], 1
    %s455 = scalar_lea.sflag [#allocation3], 1
    %456 = vsyncpa %s455, 1
    %457 = vsyncpa [#allocation6], 1
    %s458 = scalar_lea.sflag [#allocation6], 1
    %459 = vsyncpa %s458, 1
    %460 = vsyncpa [#allocation4], 1
    %s461 = scalar_lea.sflag [#allocation4], 1
    %462 = vsyncpa %s461, 1

</llo_original>
